<compile_context>
chip_gen: v7x
topology: tpu7x:2x2x1
jax: 0.10.0
libtpu: 0.0.40
codegen_flags: <defaults>
</compile_context>

<pallas_src>
import functools

import jax
import jax.numpy as jnp
from jax.experimental import pallas as pl
from jax.experimental.pallas import tpu as pltpu


def _round_up(n, m):
    return ((n + m - 1) // m) * m


def _tpu_caps():
    """Return (vmem_capacity_bytes, is_two_tensorcore_chip)."""
    kind = ""
    try:
        kind = jax.devices()[0].device_kind.lower()
    except Exception:
        pass
    is_v7 = ("v7" in kind) or ("7x" in kind)

    vmem = None
    try:
        info = pltpu.get_tpu_info()
        for name in ("vmem_capacity_bytes", "vmem_bytes", "vmem_size_bytes"):
            v = getattr(info, name, None)
            if v:
                vmem = int(v)
                break
    except Exception:
        pass
    if vmem is None:
        # v7x has 64 MiB / TensorCore; v5e / v6e have 128 MiB.
        vmem = (64 << 20) if is_v7 else (128 << 20)
    return vmem, is_v7


def _pick_tile_rows(n_rows, f, itemsize, row_multiple, target_block_bytes,
                    live_budget_bytes, two_cores):
    """Bytes-based row tile.  Tile COUNT is chosen first so padding/over-coverage
    is bounded, then the tile size is rounded to the sublane multiple."""
    row_x_bytes = max(f * itemsize, 1)
    # Live per-row VMEM footprint: double-buffered in + out blocks, ~3 f32
    # compute temps, per-row mask.
    per_row_live = 4 * row_x_bytes + 3 * f * 4 + 2 * 4
    max_rows_vmem = max(row_multiple, live_budget_bytes // per_row_live)

    target_rows = max(row_multiple, target_block_bytes // row_x_bytes)
    target_rows = min(target_rows, max_rows_vmem, _round_up(n_rows, row_multiple))

    n_tiles = pl.cdiv(n_rows, target_rows)
    if two_cores and n_rows > row_multiple:
        # Even number of grid steps so both TensorCores get equal shares.
        if n_tiles == 1:
            n_tiles = 2
        elif n_tiles % 2:
            n_tiles += 1

    tile_rows = _round_up(pl.cdiv(n_rows, n_tiles), row_multiple)
    if tile_rows >= n_rows:
        tile_rows = n_rows  # full-extent block is always legal
    return tile_rows


def _encoder_ln_kernel(x_ref, mask_ref, gamma_ref, beta_ref, o_ref, *,
                       eps, layer_scales, inv_f):
    # x_ref: (tile_rows, F); mask_ref: (tile_rows, 1) f32; gamma/beta: (1, F) f32.
    x = x_ref[...].astype(jnp.float32)

    # Hoist the mask broadcast out of the layer loop (one broadcast total).
    mb = jnp.broadcast_to(mask_ref[...], x.shape)

    # Fused residual layer stack: x <- x + scale * tanh(x) * mask.
    # TODO(synk): real EncoderLayer internals (attention/FFN) are injected
    #             externally in the source module; only this demo residual
    #             stand-in is fused here.
    for s in layer_scales:
        x = x + (jnp.tanh(x) * mb) * s

    # LayerNorm over F (centered two-pass: var >= 0 by construction, matches
    # PyTorch numerics; the extra reduction hides under HBM on this kernel).
    mean = jnp.sum(x, axis=-1, keepdims=True) * inv_f
    xc = x - mean
    var = jnp.sum(xc * xc, axis=-1, keepdims=True) * inv_f
    inv = jax.lax.rsqrt(var + eps)
    y = xc * (inv * gamma_ref[...]) + beta_ref[...]
    o_ref[...] = y.astype(o_ref.dtype)


def encoder_forward(x, mask, layer_scales, gamma, beta, *, eps=1e-6):
    """Mirrors Encoder.forward: apply each layer(x, mask), then final LayerNorm.

    x:            (..., F) activations, e.g. (B, S, F)
    mask:         one scalar per row, broadcastable to x's leading dims (B, S)
    layer_scales: static tuple of per-layer scales for the demo residual layers
    gamma, beta:  (F,) LayerNorm affine parameters
    """
    orig_shape = x.shape
    F = orig_shape[-1]
    x2 = x.reshape(-1, F)                         # free reshape (contiguous)
    R = x2.shape[0]
    mask2 = jnp.broadcast_to(mask, orig_shape[:-1]).reshape(-1, 1).astype(jnp.float32)
    gamma2 = gamma.astype(jnp.float32).reshape(1, F)
    beta2 = beta.astype(jnp.float32).reshape(1, F)

    itemsize = jnp.dtype(x.dtype).itemsize
    row_multiple = 16 if itemsize == 2 else 8     # bf16 packs 2 rows / sublane

    vmem_cap, two_cores = _tpu_caps()
    # Live block-footprint budget: tighter on the 64 MiB generation (v7x).
    live_budget = min(vmem_cap // 2, (32 << 20) if two_cores else (64 << 20))
    target_block_bytes = 4 << 20                  # ~4 MiB of x per grid step

    tile_rows = _pick_tile_rows(R, F, itemsize, row_multiple,
                                target_block_bytes, live_budget, two_cores)
    grid = (pl.cdiv(R, tile_rows),)
    vmem_limit = int(min(vmem_cap, live_budget + (16 << 20)))

    out = pl.pallas_call(
        functools.partial(
            _encoder_ln_kernel,
            eps=float(eps),
            layer_scales=tuple(float(s) for s in layer_scales),
            inv_f=1.0 / float(F),
        ),
        out_shape=jax.ShapeDtypeStruct((R, F), x.dtype),
        grid_spec=pltpu.PrefetchScalarGridSpec(
            num_scalar_prefetch=0,
            grid=grid,
            in_specs=[
                pl.BlockSpec((tile_rows, F), lambda i: (i, 0)),   # x
                pl.BlockSpec((tile_rows, 1), lambda i: (i, 0)),   # mask (per row)
                pl.BlockSpec((1, F), lambda i: (0, 0)),           # gamma
                pl.BlockSpec((1, F), lambda i: (0, 0)),           # beta
            ],
            out_specs=pl.BlockSpec((tile_rows, F), lambda i: (i, 0)),
        ),
        compiler_params=pltpu.CompilerParams(
            dimension_semantics=("parallel",),
            vmem_limit_bytes=vmem_limit,
        ),
    )(x2, mask2, gamma2, beta2)

    return out.reshape(orig_shape)


# ----- reference (plain JAX) for correctness check -----
def _encoder_ref(x, mask, layer_scales, gamma, beta, eps=1e-6):
    m = mask[..., None].astype(jnp.float32)
    y = x.astype(jnp.float32)
    for s in layer_scales:
        y = y + s * jnp.tanh(y) * m
    mean = jnp.mean(y, axis=-1, keepdims=True)
    var = jnp.mean((y - mean) ** 2, axis=-1, keepdims=True)
    return ((y - mean) * jax.lax.rsqrt(var + eps) * gamma + beta).astype(x.dtype)


if __name__ == "__main__":
    B, S, F = 2, 8, 32          # batch, seq, features
    key = jax.random.PRNGKey(0)
    kx, kg, kb, km = jax.random.split(key, 4)

    x = jax.random.normal(kx, (B, S, F), dtype=jnp.float32)
    mask = (jax.random.uniform(km, (B, S)) > 0.2).astype(jnp.float32)   # (B, S) padding mask

    # LayerNorm params (PyTorch default weight=1 / bias=0, slightly perturbed
    # so the affine part is exercised).
    gamma = jnp.ones((F,), jnp.float32) + 0.01 * jax.random.normal(kg, (F,), jnp.float32)
    beta = jnp.zeros((F,), jnp.float32) + 0.01 * jax.random.normal(kb, (F,), jnp.float32)

    # Demo stand-in for the injected EncoderLayer stack (fused into the kernel).
    layer_scales = (0.1, 0.2)

    out = jax.block_until_ready(encoder_forward(x, mask, layer_scales, gamma, beta))
    ref = _encoder_ref(x, mask, layer_scales, gamma, beta)

    assert out.shape == (B, S, F)
    assert jnp.allclose(out, ref, atol=3e-5, rtol=3e-5), "mismatch vs reference"
    print("KERNEL_OK")
</pallas_src>

<mosaic_0001>
module attributes {stable_mosaic.version = 11 : i64} {
  func.func @_encoder_ln_kernel(%arg0: i32, %arg1: memref<16x32xf32, #tpu.memory_space<vmem>>, %arg2: memref<16x1xf32, #tpu.memory_space<vmem>>, %arg3: memref<1x32xf32, #tpu.memory_space<vmem>>, %arg4: memref<1x32xf32, #tpu.memory_space<vmem>>, %arg5: memref<16x32xf32, #tpu.memory_space<vmem>>) attributes {dimension_semantics = [#tpu.dimension_semantics<parallel>], iteration_bounds = array<i64: 1>, scalar_prefetch = 0 : i64, scratch_operands = 0 : i64, tpu.core_type = #tpu.core_type<tc>, window_params = [{transform_indices = @transform_0, window_bounds = array<i64: 16, 32>}, {transform_indices = @transform_1, window_bounds = array<i64: 16, 1>}, {pipeline_mode = #tpu.pipeline_mode<synchronous>, transform_indices = @transform_2, window_bounds = array<i64: 1, 32>}, {pipeline_mode = #tpu.pipeline_mode<synchronous>, transform_indices = @transform_3, window_bounds = array<i64: 1, 32>}, {transform_indices = @transform_4, window_bounds = array<i64: 16, 32>}]} {
    %c0 = arith.constant 0 : index
    %c0_0 = arith.constant 0 : index
    %0 = vector.load %arg1[%c0, %c0_0] : memref<16x32xf32, #tpu.memory_space<vmem>>, vector<16x32xf32>
    %c0_1 = arith.constant 0 : index
    %c0_2 = arith.constant 0 : index
    %1 = vector.load %arg2[%c0_1, %c0_2] : memref<16x1xf32, #tpu.memory_space<vmem>>, vector<16x1xf32>
    %2 = vector.shape_cast %1 : vector<16x1xf32> to vector<16x1xf32>
    %3 = vector.broadcast %2 : vector<16x1xf32> to vector<16x32xf32>
    %4 = math.tanh %0 : vector<16x32xf32>
    %5 = arith.mulf %4, %3 : vector<16x32xf32>
    %cst = arith.constant 1.000000e-01 : f32
    %6 = vector.broadcast %cst : f32 to vector<16x32xf32>
    %7 = arith.mulf %5, %6 : vector<16x32xf32>
    %8 = arith.addf %0, %7 : vector<16x32xf32>
    %9 = math.tanh %8 : vector<16x32xf32>
    %10 = arith.mulf %9, %3 : vector<16x32xf32>
    %cst_3 = arith.constant 2.000000e-01 : f32
    %11 = vector.broadcast %cst_3 : f32 to vector<16x32xf32>
    %12 = arith.mulf %10, %11 : vector<16x32xf32>
    %13 = arith.addf %8, %12 : vector<16x32xf32>
    %cst_4 = arith.constant dense<0.000000e+00> : vector<16xf32>
    %14 = vector.multi_reduction <add>, %13, %cst_4 [1] : vector<16x32xf32> to vector<16xf32>
    %15 = vector.shape_cast %14 : vector<16xf32> to vector<16x1xf32>
    %cst_5 = arith.constant 3.125000e-02 : f32
    %16 = vector.broadcast %cst_5 : f32 to vector<16x1xf32>
    %17 = arith.mulf %15, %16 : vector<16x1xf32>
    %18 = vector.broadcast %17 : vector<16x1xf32> to vector<16x32xf32>
    %19 = arith.subf %13, %18 : vector<16x32xf32>
    %20 = arith.mulf %19, %19 : vector<16x32xf32>
    %cst_6 = arith.constant dense<0.000000e+00> : vector<16xf32>
    %21 = vector.multi_reduction <add>, %20, %cst_6 [1] : vector<16x32xf32> to vector<16xf32>
    %22 = vector.shape_cast %21 : vector<16xf32> to vector<16x1xf32>
    %cst_7 = arith.constant 3.125000e-02 : f32
    %23 = vector.broadcast %cst_7 : f32 to vector<16x1xf32>
    %24 = arith.mulf %22, %23 : vector<16x1xf32>
    %cst_8 = arith.constant 9.99999997E-7 : f32
    %25 = vector.broadcast %cst_8 : f32 to vector<16x1xf32>
    %26 = arith.addf %24, %25 : vector<16x1xf32>
    %27 = math.rsqrt %26 : vector<16x1xf32>
    %c0_9 = arith.constant 0 : index
    %c0_10 = arith.constant 0 : index
    %28 = vector.load %arg3[%c0_9, %c0_10] : memref<1x32xf32, #tpu.memory_space<vmem>>, vector<1x32xf32>
    %29 = vector.broadcast %27 : vector<16x1xf32> to vector<16x32xf32>
    %30 = vector.broadcast %28 : vector<1x32xf32> to vector<16x32xf32>
    %31 = arith.mulf %29, %30 : vector<16x32xf32>
    %32 = arith.mulf %19, %31 : vector<16x32xf32>
    %c0_11 = arith.constant 0 : index
    %c0_12 = arith.constant 0 : index
    %33 = vector.load %arg4[%c0_11, %c0_12] : memref<1x32xf32, #tpu.memory_space<vmem>>, vector<1x32xf32>
    %34 = vector.broadcast %33 : vector<1x32xf32> to vector<16x32xf32>
    %35 = arith.addf %32, %34 : vector<16x32xf32>
    %c0_13 = arith.constant 0 : index
    %c0_14 = arith.constant 0 : index
    %36 = vector.load %arg5[%c0_13, %c0_14] : memref<16x32xf32, #tpu.memory_space<vmem>>, vector<16x32xf32>
    tpu.vector_store %arg5[%c0_13, %c0_14], %35 {strides = array<i32>} : memref<16x32xf32, #tpu.memory_space<vmem>>, vector<16x32xf32>,
    return
  }
  func.func @transform_0(%arg0: i32) -> (i32, i32) {
    %c0_i32 = arith.constant 0 : i32
    %c0_i32_0 = arith.constant 0 : i32
    return %arg0, %c0_i32 : i32, i32
  }
  func.func @transform_1(%arg0: i32) -> (i32, i32) {
    %c0_i32 = arith.constant 0 : i32
    %c0_i32_0 = arith.constant 0 : i32
    return %arg0, %c0_i32 : i32, i32
  }
  func.func @transform_2(%arg0: i32) -> (i32, i32) {
    %c0_i32 = arith.constant 0 : i32
    %c0_i32_0 = arith.constant 0 : i32
    %c0_i32_1 = arith.constant 0 : i32
    return %c0_i32, %c0_i32_0 : i32, i32
  }
  func.func @transform_3(%arg0: i32) -> (i32, i32) {
    %c0_i32 = arith.constant 0 : i32
    %c0_i32_0 = arith.constant 0 : i32
    %c0_i32_1 = arith.constant 0 : i32
    return %c0_i32, %c0_i32_0 : i32, i32
  }
  func.func @transform_4(%arg0: i32) -> (i32, i32) {
    %c0_i32 = arith.constant 0 : i32
    %c0_i32_0 = arith.constant 0 : i32
    return %arg0, %c0_i32 : i32, i32
  }
}

</mosaic_0001>

<llo_original>
// kernel: tpu_custom_call.1
$region0: #{tpu_custom_call.1}
  #allocation0 [shape = 'u32[]', space=smem, size = 0x4, offset = 0x4, fixed_abs, tag = 'smem constant byte address 0x4 - core index']
  #allocation1 [shape = 'u32[144,128]{1,0:T(1,128)}', space=vmem, size = 0x12000, scoped, tag = 'internal scratch']
  %s0 = inlined_call_operand.hbm [shape: f32[16,32], index: 0, kind: input, shape index: {}]
  %s1 = inlined_call_operand.hbm [shape: f32[16,1], index: 1, kind: input, shape index: {}]
  %s2 = inlined_call_operand.hbm [shape: f32[1,32], index: 2, kind: input, shape index: {}]
  %s3 = inlined_call_operand.hbm [shape: f32[1,32], index: 3, kind: input, shape index: {}]
  %s4 = inlined_call_operand.hbm [shape: f32[16,32], index: 4, kind: output, shape index: {}]
  %s5 = sld [smem:[#allocation0]]
  $region42: #{tpu_custom_call.1} parent=0
    _
  %s7 = ssub.s32 1, %s5
  %s8 = scalar_select 0, %s7, %s5
  $region1: #{tpu_custom_call.1} parent=0
    #allocation2 [shape = 'u8[8192]{0}', space=vmem, size = 0x2000, scoped, tag = 'input window, operand 0, single buffered']
    #allocation3 [shape = 's32[1]{0}', space=sflag, size = 0x4, scoped, tag = 'scoped memory for tpu_custom_call.1']
    #allocation4 [shape = 's32[1]{0}', space=sflag, size = 0x4, scoped, tag = 'scoped memory for tpu_custom_call.1']
    #allocation5 [shape = 'u8[8192]{0}', space=vmem, size = 0x2000, scoped, tag = 'input window, operand 1, single buffered']
    #allocation6 [shape = 's32[1]{0}', space=sflag, size = 0x4, scoped, tag = 'scoped memory for tpu_custom_call.1']
    #allocation7 [shape = 'u8[512]{0}', space=vmem, size = 0x400, scoped, tag = 'input window, operand 2, single buffered']
    #allocation8 [shape = 'u8[512]{0}', space=vmem, size = 0x400, scoped, tag = 'input window, operand 3, single buffered']
    #allocation9 [shape = 's32[1]{0}', space=sflag, size = 0x4, scoped, tag = 'scoped memory for tpu_custom_call.1']
    #allocation10 [shape = 'u8[8192]{0}', space=vmem, size = 0x2000, scoped, tag = 'output window, operand 0, single buffered']
    %9 = vsyncpa [#allocation3], 0
    %10 = vsyncpa [#allocation6], 0
    %11 = vsyncpa [#allocation9], 0
    %12 = vsyncpa [#allocation4], 0
    // Predicated region
    $region2: #{tpu_custom_call.1} parent=1 // pred_check
      _
    $region3: #{tpu_custom_call.1} parent=1 // pred_check_branch
      %14 = sbr.rel (0) target = $region5
    $region4: #{tpu_custom_call.1} parent=1 // pred_region
      %s16 = ssub.s32 256, 256
      %17 = vsyncadd [#allocation3], %s16
      %s18 = sshll.u32 [#allocation2], 4
      %s19 = int_to_ptr.vmem [resolvable:$true] %s18
      %24 = dma.hbm_to_vmem [thread:$0]  %s0, 256, %s19, [#allocation3], 128, 128, 8
    $region5: #{tpu_custom_call.1} parent=1 // pred_fallthru
      _
    // Predicated region
    $region6: #{tpu_custom_call.1} parent=1 // pred_check
      _
    $region7: #{tpu_custom_call.1} parent=1 // pred_check_branch
      %26 = sbr.rel (0) target = $region9
    $region8: #{tpu_custom_call.1} parent=1 // pred_region
      %s28 = ssub.s32 256, 256
      %29 = vsyncadd [#allocation6], %s28
      %s30 = sshll.u32 [#allocation5], 4
      %s31 = int_to_ptr.vmem [resolvable:$true] %s30
      %36 = dma.hbm_to_vmem [thread:$0]  %s1, 256, %s31, [#allocation6], 128, 128, 8
    $region9: #{tpu_custom_call.1} parent=1 // pred_fallthru
      _
    // Predicated region
    $region10: #{tpu_custom_call.1} parent=1 // pred_check
      _
    $region11: #{tpu_custom_call.1} parent=1 // pred_check_branch
      %38 = sbr.rel (0) target = $region13
    $region12: #{tpu_custom_call.1} parent=1 // pred_region
      %s40 = ssub.s32 16, 16
      %41 = vsyncadd [#allocation6], %s40
      %s43 = sshll.u32 [#allocation7], 4
      %s44 = int_to_ptr.vmem [resolvable:$true] %s43
      %46 = dma.hbm_to_vmem [thread:$0]  %s2, 16, %s44, [#allocation6]
    $region13: #{tpu_custom_call.1} parent=1 // pred_fallthru
      _
    // Predicated region
    $region14: #{tpu_custom_call.1} parent=1 // pred_check
      _
    $region15: #{tpu_custom_call.1} parent=1 // pred_check_branch
      %48 = sbr.rel (0) target = $region17
    $region16: #{tpu_custom_call.1} parent=1 // pred_region
      %s50 = ssub.s32 16, 16
      %51 = vsyncadd [#allocation9], %s50
      %s53 = sshll.u32 [#allocation8], 4
      %s54 = int_to_ptr.vmem [resolvable:$true] %s53
      %56 = dma.hbm_to_vmem [thread:$0]  %s3, 16, %s54, [#allocation9]
    $region17: #{tpu_custom_call.1} parent=1 // pred_fallthru
      _
    // Predicated region
    $region18: #{tpu_custom_call.1} parent=1 // pred_check
      _
    $region19: #{tpu_custom_call.1} parent=1 // pred_check_branch
      %58 = sbr.rel (0) target = $region21
    $region20: #{tpu_custom_call.1} parent=1 // pred_region
      %59 = dma.done [#allocation3], 256
    $region21: #{tpu_custom_call.1} parent=1 // pred_fallthru
      _
    // Predicated region
    $region22: #{tpu_custom_call.1} parent=1 // pred_check
      _
    $region23: #{tpu_custom_call.1} parent=1 // pred_check_branch
      %61 = sbr.rel (0) target = $region25
    $region24: #{tpu_custom_call.1} parent=1 // pred_region
      %62 = dma.done [#allocation6], 256
    $region25: #{tpu_custom_call.1} parent=1 // pred_fallthru
      _
    // Predicated region
    $region26: #{tpu_custom_call.1} parent=1 // pred_check
      _
    $region27: #{tpu_custom_call.1} parent=1 // pred_check_branch
      %64 = sbr.rel (0) target = $region29
    $region28: #{tpu_custom_call.1} parent=1 // pred_region
      %65 = dma.done [#allocation6], 16
    $region29: #{tpu_custom_call.1} parent=1 // pred_fallthru
      _
    // Predicated region
    $region30: #{tpu_custom_call.1} parent=1 // pred_check
      _
    $region31: #{tpu_custom_call.1} parent=1 // pred_check_branch
      %67 = sbr.rel (0) target = $region33
    $region32: #{tpu_custom_call.1} parent=1 // pred_region
      %68 = dma.done [#allocation9], 16
    $region33: #{tpu_custom_call.1} parent=1 // pred_fallthru
      _
    %v69 = vld [vmem:[#allocation2] sm:$0xff]
    %v70 = vld [vmem:[#allocation2 + $0x8] sm:$0xff]
    %v71 = vld [vmem:[#allocation5] sm:$0xff]
    %v72 = vld [vmem:[#allocation5 + $0x8] sm:$0xff]
    %74 = vset.pattern.permute.xlu0 0
    %75 = vperm.xlu0 %74, %v71
    %v76 = vpop.permute.xlu0 %75
    %79 = vset.pattern.permute.xlu0 0
    %80 = vperm.xlu0 %79, %v72
    %v81 = vpop.permute.xlu0 %80
    %v83 = vtanh.pop %v69
    %v84 = vtanh.pop %v70
    %v85 = vmul.f32 %v83, %v76
    %v86 = vmul.f32 %v84, %v81
    %v87 = vmul.f32 %v85, 0.1
    %v88 = vmul.f32 %v86, 0.1
    %v89 = vadd.f32 %v69, %v87
    %v90 = vadd.f32 %v70, %v88
    %v91 = vtanh.pop %v89
    %v92 = vtanh.pop %v90
    %v93 = vmul.f32 %v91, %v76
    %v94 = vmul.f32 %v92, %v81
    %v95 = vmul.f32 %v93, 0.2
    %v96 = vmul.f32 %v94, 0.2
    %v97 = vadd.f32 %v89, %v95
    %v98 = vadd.f32 %v90, %v96
    %vm99 = vcmask 261120
    %v100 = vsel %vm99, %v97, 0.0
    %101 = vadd.xlane.f32.xlu0 %v100
    %v102 = vpop.xlane.xlu0 %101
    %v103 = vsel %vm99, %v98, 0.0
    %104 = vadd.xlane.f32.xlu0 %v103
    %v105 = vpop.xlane.xlu0 %104
    %v106 = vmul.f32 %v102, 0.03125
    %v107 = vmul.f32 %v105, 0.03125
    %v108 = vsub.f32 %v97, %v106
    %v109 = vsub.f32 %v98, %v107
    %v110 = vmul.f32 %v108, %v108
    %v111 = vmul.f32 %v109, %v109
    %v112 = vsel %vm99, %v110, 0.0
    %113 = vadd.xlane.f32.xlu0 %v112
    %v114 = vpop.xlane.xlu0 %113
    %v115 = vsel %vm99, %v111, 0.0
    %116 = vadd.xlane.f32.xlu0 %v115
    %v117 = vpop.xlane.xlu0 %116
    %v118 = vmul.f32 %v114, 0.03125
    %v119 = vmul.f32 %v117, 0.03125
    %v120 = vadd.f32 %v118, 1e-06
    %v121 = vadd.f32 %v119, 1e-06
    %v122 = vrsqrt.pop %v120
    %v123 = vrsqrt.pop %v121
    %v124 = vld [vmem:[#allocation7] sm:$0x1]
    %v126 = vlaneseq
    %v127 = vshrl.u32 %v126, 7
    %v128 = vsub.s32 0, %v127
    %v129 = vrot.slane %v124, %v128
    %v131 = vmul.f32 %v122, %v129
    %v132 = vmul.f32 %v123, %v129
    %v133 = vmul.f32 %v108, %v131
    %v134 = vmul.f32 %v109, %v132
    %v135 = vld [vmem:[#allocation8] sm:$0x1]
    %v137 = vlaneseq
    %v138 = vshrl.u32 %v137, 7
    %v139 = vsub.s32 0, %v138
    %v140 = vrot.slane %v135, %v139
    %v142 = vadd.f32 %v133, %v140
    %v143 = vadd.f32 %v134, %v140
    %144 = vst.msk [vmem:[#allocation10] sm:$0xff] %vm99, %v142
    %145 = vst.msk [vmem:[#allocation10 + $0x8] sm:$0xff] %vm99, %v143
    // Predicated region
    $region34: #{tpu_custom_call.1} parent=1 // pred_check
      _
    $region35: #{tpu_custom_call.1} parent=1 // pred_check_branch
      %147 = sbr.rel (0) target = $region37
    $region36: #{tpu_custom_call.1} parent=1 // pred_region
      %s149 = ssub.s32 256, 256
      %150 = vsyncadd [#allocation4], %s149
      %s151 = sshll.u32 [#allocation10], 4
      %s152 = int_to_ptr.vmem [resolvable:$true] %s151
      %157 = dma.vmem_to_hbm [thread:$0]  %s152, 256, %s4, [#allocation4], 128, 128, 8
    $region37: #{tpu_custom_call.1} parent=1 // pred_fallthru
      _
    // Predicated region
    $region38: #{tpu_custom_call.1} parent=1 // pred_check
      _
    $region39: #{tpu_custom_call.1} parent=1 // pred_check_branch
      %159 = sbr.rel (0) target = $region41
    $region40: #{tpu_custom_call.1} parent=1 // pred_region
      %160 = dma.done [#allocation4], 256
    $region41: #{tpu_custom_call.1} parent=1 // pred_fallthru
      _
    %161 = vsyncpa [#allocation3], 1
    %162 = vsyncpa [#allocation6], 1
    %163 = vsyncpa [#allocation9], 1
    %164 = vsyncpa [#allocation4], 1

</llo_original>
